<compile_context>
chip_gen: v6e
topology: v6e:2x2x1
jax: 0.10.0
libtpu: 0.0.40
codegen_flags: <defaults>
</compile_context>

<pallas_src>
import functools

import jax
import jax.numpy as jnp
from jax import lax
from jax.experimental import pallas as pl
from jax.experimental.pallas import tpu as pltpu


_LANE = 128
_SUBLANE = 8
# Per-input-block byte budget (Pallas double-buffers it); conservative enough
# to fit the default scoped-VMEM limits on v5e/v6e/v7x with headroom.
_BLOCK_BYTES = 2 * 1024 * 1024


def _round_up(x, m):
    return ((x + m - 1) // m) * m


def _pow_p(x, p):
    """x ** p.  Integer p -> lax.integer_pow (VALU multiply chain); avoids the
    exp(p*log(x)) EUP path and matches PyTorch for negative inputs with an
    integral exponent."""
    p = float(p)
    if p.is_integer():
        return lax.integer_pow(x, int(p))
    # TODO(synk): non-integral p with negative inputs is NaN (same as the
    # PyTorch reference on such inputs).
    return x ** p


def _gemp_kernel_onepass(x_ref, o_ref, *, p, eps, inv_n, n_total, mask_n):
    """Whole reduction axis resident in one VMEM block; grid is rows only."""
    x = x_ref[...].astype(jnp.float32)
    if mask_n:
        col = lax.broadcasted_iota(jnp.int32, x.shape, 1)
        x = jnp.where(col < n_total, x, 0.0)
    mean_p = jnp.sum(_pow_p(x, p), axis=-1, keepdims=True) * inv_n
    o_ref[...] = ((mean_p + eps) ** (1.0 / p)).astype(o_ref.dtype)


def _gemp_kernel_stream(x_ref, o_ref, acc_ref, *, p, eps, inv_n, n_total, tn,
                        mask_n):
    """Reduction axis streamed across grid axis 1 with a resident accumulator."""
    n_idx = pl.program_id(1)

    @pl.when(n_idx == 0)
    def _init():
        acc_ref[...] = jnp.zeros_like(acc_ref)

    x = x_ref[...].astype(jnp.float32)
    if mask_n:
        # Zero the padded lanes of the last (partial) N tile.
        col = lax.broadcasted_iota(jnp.int32, x.shape, 1) + n_idx * tn
        x = jnp.where(col < n_total, x, 0.0)

    acc_ref[...] += jnp.sum(_pow_p(x, p), axis=-1, keepdims=True)

    @pl.when(n_idx == pl.num_programs(1) - 1)
    def _finalize():
        mean_p = acc_ref[...] * inv_n
        o_ref[...] = ((mean_p + eps) ** (1.0 / p)).astype(o_ref.dtype)


def gemp(x, p=3.0, eps=1e-12):
    """Generalized-mean pooling matching the PyTorch GeMP module's forward."""
    if x.ndim == 2:
        # (B, F): rows on sublanes, F (reduction) on lanes -> output (B,)
        x2 = x
        out_shape = (x.shape[0],)
    else:
        B, C = x.shape[:2]
        x2 = x.reshape(B * C, -1)          # (B*C, N), lane-dense reduction
        out_shape = (B, C)

    R, N = x2.shape
    tn_full = _round_up(N, _LANE)
    inv_n = 1.0 / float(N)

    if tn_full * _SUBLANE * 4 <= _BLOCK_BYTES:
        # --- One-pass path: whole reduction axis fits a single block. -------
        tr_cap = max(_SUBLANE,
                     (_BLOCK_BYTES // (tn_full * 4)) // _SUBLANE * _SUBLANE)
        TR = min(_round_up(R, _SUBLANE), tr_cap, 1024)
        mask_n = tn_full != N
        kernel = functools.partial(
            _gemp_kernel_onepass, p=float(p), eps=float(eps), inv_n=inv_n,
            n_total=N, mask_n=mask_n)
        out = pl.pallas_call(
            kernel,
            out_shape=jax.ShapeDtypeStruct((R, 1), x2.dtype),
            grid_spec=pltpu.PrefetchScalarGridSpec(
                num_scalar_prefetch=0,
                grid=(pl.cdiv(R, TR),),
                in_specs=[pl.BlockSpec((TR, tn_full), lambda r: (r, 0))],
                out_specs=pl.BlockSpec((TR, 1), lambda r: (r, 0)),
            ),
            compiler_params=pltpu.CompilerParams(
                dimension_semantics=("parallel",)),
        )(x2)
    else:
        # --- Streaming path: tile the reduction axis, accumulate in VMEM. ---
        TR = min(256, _round_up(R, _SUBLANE))
        tn_cap = max(_LANE, (_BLOCK_BYTES // (TR * 4)) // _LANE * _LANE)
        TN = min(tn_full, tn_cap)
        grid = (pl.cdiv(R, TR), pl.cdiv(N, TN))
        mask_n = (grid[1] * TN) != N
        kernel = functools.partial(
            _gemp_kernel_stream, p=float(p), eps=float(eps), inv_n=inv_n,
            n_total=N, tn=TN, mask_n=mask_n)
        out = pl.pallas_call(
            kernel,
            out_shape=jax.ShapeDtypeStruct((R, 1), x2.dtype),
            grid_spec=pltpu.PrefetchScalarGridSpec(
                num_scalar_prefetch=0,
                grid=grid,
                in_specs=[pl.BlockSpec((TR, TN), lambda r, n: (r, n))],
                out_specs=pl.BlockSpec((TR, 1), lambda r, n: (r, 0)),
                scratch_shapes=[pltpu.VMEM((TR, 1), jnp.float32)],
            ),
            compiler_params=pltpu.CompilerParams(
                dimension_semantics=("parallel", "arbitrary")),
        )(x2)

    return out.reshape(out_shape)


def _gemp_ref(x, p=3.0, eps=1e-12):
    # Pure-JAX reference mirroring the PyTorch forward (f32 math).
    if x.ndim != 2:
        B, C = x.shape[:2]
        x = x.reshape(B, C, -1)
    xf = x.astype(jnp.float32)
    return (jnp.mean(xf ** p, axis=-1) + eps) ** (1.0 / p)


if __name__ == "__main__":
    key = jax.random.PRNGKey(0)
    k0, k1, k2 = jax.random.split(key, 3)

    # 1) NCHW path (one-pass kernel).  Non-negative values (typical post-ReLU
    #    features), matching the intended use of GeM pooling.
    x = jax.random.uniform(k0, (2, 4, 16, 16), dtype=jnp.float32)
    out = jax.block_until_ready(gemp(x, p=3.0, eps=1e-12))
    ref = _gemp_ref(x, p=3.0, eps=1e-12)
    assert out.shape == (2, 4), out.shape
    assert jnp.allclose(out, ref, rtol=1e-5, atol=1e-6), (out, ref)

    # 2) 2-D path: mean over the last dim directly -> shape (B,)
    x2d = jax.random.uniform(k1, (2, 32), dtype=jnp.float32)
    out2 = jax.block_until_ready(gemp(x2d, p=3.0, eps=1e-12))
    ref2 = _gemp_ref(x2d, p=3.0, eps=1e-12)
    assert out2.shape == (2,), out2.shape
    assert jnp.allclose(out2, ref2, rtol=1e-5, atol=1e-6), (out2, ref2)

    # 3) Large spatial extent -> streaming path with a masked partial N tile.
    x3 = jax.random.uniform(k2, (1, 3, 300, 300), dtype=jnp.float32)
    out3 = jax.block_until_ready(gemp(x3, p=3.0, eps=1e-12))
    ref3 = _gemp_ref(x3, p=3.0, eps=1e-12)
    assert out3.shape == (1, 3), out3.shape
    assert jnp.allclose(out3, ref3, rtol=1e-5, atol=1e-6), (out3, ref3)

    print("KERNEL_OK")
</pallas_src>

<mosaic_0001>
module attributes {stable_mosaic.version = 11 : i64} {
  func.func @_gemp_kernel_onepass(%arg0: i32, %arg1: memref<8x256xf32, #tpu.memory_space<vmem>>, %arg2: memref<8x1xf32, #tpu.memory_space<vmem>>) attributes {dimension_semantics = [#tpu.dimension_semantics<parallel>], iteration_bounds = array<i64: 1>, scalar_prefetch = 0 : i64, scratch_operands = 0 : i64, tpu.core_type = #tpu.core_type<tc>, window_params = [{transform_indices = @transform_0, window_bounds = array<i64: 8, 256>}, {transform_indices = @transform_1, window_bounds = array<i64: 8, 1>}]} {
    %c0 = arith.constant 0 : index
    %c0_0 = arith.constant 0 : index
    %0 = vector.load %arg1[%c0, %c0_0] : memref<8x256xf32, #tpu.memory_space<vmem>>, vector<8x256xf32>
    %1 = arith.mulf %0, %0 : vector<8x256xf32>
    %2 = arith.mulf %0, %1 : vector<8x256xf32>
    %cst = arith.constant dense<0.000000e+00> : vector<8xf32>
    %3 = vector.multi_reduction <add>, %2, %cst [1] : vector<8x256xf32> to vector<8xf32>
    %4 = vector.shape_cast %3 : vector<8xf32> to vector<8x1xf32>
    %cst_1 = arith.constant 3.906250e-03 : f32
    %5 = vector.broadcast %cst_1 : f32 to vector<8x1xf32>
    %6 = arith.mulf %4, %5 : vector<8x1xf32>
    %cst_2 = arith.constant 9.99999996E-13 : f32
    %7 = vector.broadcast %cst_2 : f32 to vector<8x1xf32>
    %8 = arith.addf %6, %7 : vector<8x1xf32>
    %cst_3 = arith.constant 0.333333343 : f32
    %9 = vector.broadcast %cst_3 : f32 to vector<8x1xf32>
    %10 = math.powf %8, %9 : vector<8x1xf32>
    %c0_4 = arith.constant 0 : index
    %c0_5 = arith.constant 0 : index
    %11 = vector.load %arg2[%c0_4, %c0_5] : memref<8x1xf32, #tpu.memory_space<vmem>>, vector<8x1xf32>
    tpu.vector_store %arg2[%c0_4, %c0_5], %10 {strides = array<i32>} : memref<8x1xf32, #tpu.memory_space<vmem>>, vector<8x1xf32>,
    return
  }
  func.func @transform_0(%arg0: i32) -> (i32, i32) {
    %c0_i32 = arith.constant 0 : i32
    %c0_i32_0 = arith.constant 0 : i32
    return %arg0, %c0_i32 : i32, i32
  }
  func.func @transform_1(%arg0: i32) -> (i32, i32) {
    %c0_i32 = arith.constant 0 : i32
    %c0_i32_0 = arith.constant 0 : i32
    return %arg0, %c0_i32 : i32, i32
  }
}

</mosaic_0001>

<llo_original>
// kernel: tpu_custom_call.1
$region0: #{tpu_custom_call.1}
  #allocation0 [shape = 'u32[]', space=smem, size = 0x4, offset = 0x4, fixed_abs, tag = 'smem constant byte address 0x4 - core index']
  #allocation1 [shape = 'u32[144,128]{1,0:T(1,128)}', space=vmem, size = 0x12000, scoped, tag = 'internal scratch']
  %s0 = inlined_call_operand.hbm [shape: f32[8,256], index: 0, kind: input, shape index: {}]
  %s1 = inlined_call_operand.vmem [shape: f32[8,1], index: 1, kind: output, shape index: {}]
  %s2 = sld [smem:[#allocation0]]
  $region18: #{tpu_custom_call.1} parent=0
    _
  %s4 = ssub.s32 1, %s2
  %s5 = scalar_select 0, %s4, %s2
  $region1: #{tpu_custom_call.1} parent=0
    #allocation2 [shape = 'u8[8192]{0}', space=vmem, size = 0x2000, scoped, tag = 'input window, operand 0, single buffered']
    #allocation3 [shape = 's32[1]{0}', space=sflag, size = 0x4, scoped, tag = 'scoped memory for tpu_custom_call.1']
    %6 = vsyncpa [#allocation3], 0
    // Predicated region
    $region2: #{tpu_custom_call.1} parent=1 // pred_check
      _
    $region3: #{tpu_custom_call.1} parent=1 // pred_check_branch
      %8 = sbr.rel (0) target = $region5
    $region4: #{tpu_custom_call.1} parent=1 // pred_region
      %s10 = ssub.s32 256, 256
      %11 = vsyncadd [#allocation3], %s10
      %s13 = sshll.u32 [#allocation2], 4
      %s14 = int_to_ptr.vmem [resolvable:$true] %s13
      %16 = dma.hbm_to_vmem [thread:$0]  %s0, 256, %s14, [#allocation3]
    $region5: #{tpu_custom_call.1} parent=1 // pred_fallthru
      _
    // Predicated region
    $region6: #{tpu_custom_call.1} parent=1 // pred_check
      _
    $region7: #{tpu_custom_call.1} parent=1 // pred_check_branch
      %18 = sbr.rel (0) target = $region9
    $region8: #{tpu_custom_call.1} parent=1 // pred_region
      %19 = dma.done [#allocation3], 256
    $region9: #{tpu_custom_call.1} parent=1 // pred_fallthru
      _
    %v20 = vld [vmem:[#allocation2] sm:$0xff]
    %v21 = vld [vmem:[#allocation2 + $0x8] sm:$0xff]
    %v22 = vmul.f32 %v20, %v20
    %v23 = vmul.f32 %v21, %v21
    %v24 = vmul.f32 %v20, %v22
    %v25 = vmul.f32 %v21, %v23
    %v26 = vadd.f32 %v24, %v25
    %27 = vadd.xlane.f32.xlu0 %v26
    %v28 = vpop.xlane.xlu0 %27
    %v29 = vmul.f32 %v28, 0.00390625
    %v30 = vadd.f32 %v29, 1e-12
    %v31 = vpow.f32 %v30, 0.33333334
    %vm32 = vcmask 7168
    %33 = vst.msk [vmem:[%s1] sm:$0xff] %vm32, %v31
    // Predicated region
    $region10: #{tpu_custom_call.1} parent=1 // pred_check
      _
    $region11: #{tpu_custom_call.1} parent=1 // pred_check_branch
      %35 = sbr.rel (0) target = $region13
    $region12: #{tpu_custom_call.1} parent=1 // pred_region
      _
    $region13: #{tpu_custom_call.1} parent=1 // pred_fallthru
      _
    // Predicated region
    $region14: #{tpu_custom_call.1} parent=1 // pred_check
      _
    $region15: #{tpu_custom_call.1} parent=1 // pred_check_branch
      %37 = sbr.rel (0) target = $region17
    $region16: #{tpu_custom_call.1} parent=1 // pred_region
      _
    $region17: #{tpu_custom_call.1} parent=1 // pred_fallthru
      _
    %38 = vsyncpa [#allocation3], 1

</llo_original>
